<compile_context>
chip_gen: v7x
topology: tpu7x:2x2x1
jax: 0.10.0
libtpu: 0.0.40
codegen_flags: <defaults>
</compile_context>

<pallas_src>
import jax
import jax.numpy as jnp
from jax import lax
from jax.experimental import pallas as pl
from jax.experimental.pallas import tpu as pltpu

LAMDA = 0.5
TEMPERATURE = 0.07


def _supcon_tile_kernel(feat_ref, lab_c_ref, dom_c_ref, lab_r_ref, dom_r_ref,
                        loss_ref, nan_ref):
    i = pl.program_id(0)
    B = feat_ref.shape[0]
    TQ = lab_c_ref.shape[0]

    # --- L2 normalize keys (torch F.normalize: x / max(||x||, 1e-12)) ---
    f = feat_ref[...].astype(jnp.float32)                                # (B, D)
    inv_k = lax.rsqrt(jnp.maximum(jnp.sum(f * f, axis=1, keepdims=True), 1e-24))
    fk = f * inv_k                                                       # normalized keys

    # --- anchor slab = rows [i*TQ, i*TQ+TQ) of the resident features ---
    row0 = pl.multiple_of(i * TQ, TQ)
    a = feat_ref[pl.ds(row0, TQ), :].astype(jnp.float32)                 # (TQ, D)
    inv_a = lax.rsqrt(jnp.maximum(jnp.sum(a * a, axis=1, keepdims=True), 1e-24))
    # fold 1/temperature into the anchor scaling (saves a (TQ, B) multiply)
    fa = a * (inv_a * jnp.float32(1.0 / TEMPERATURE))

    # --- (TQ, B) similarities / temperature on the MXU (q.k^T contraction) ---
    s = lax.dot_general(fa, fk, dimension_numbers=(((1,), (1,)), ((), ())),
                        preferred_element_type=jnp.float32)

    # --- pairwise masks from broadcast compares (no (TQ, B) iotas built) ---
    same_label = lab_c_ref[...] == lab_r_ref[...]                        # (TQ, B)
    same_dom = dom_c_ref[...] == dom_r_ref[...]                          # (TQ, B)
    row_ids = row0 + lax.broadcasted_iota(jnp.int32, (TQ, 1), 0)
    col_ids = lax.broadcasted_iota(jnp.int32, (1, B), 1)
    not_self = row_ids != col_ids                                        # (TQ, B)

    w = jnp.where(same_dom, jnp.float32(LAMDA), jnp.float32(1.0 - LAMDA))
    we = jnp.where(not_self, w * jnp.exp(s), 0.0)    # self term excluded everywhere

    pos_mask = same_label & not_self
    pos_term = jnp.where(same_label, we, 0.0)        # == where(pos_mask, w*exp(s), 0)

    # denominator runs over all j != i (pos ∪ neg == not_self), + 1e-5 as in torch
    denom = jnp.sum(we, axis=1, keepdims=True) + 1e-5                    # (TQ, 1)
    inv_denom = 1.0 / denom                          # TQ reciprocals, not TQ*B divides

    num_pos = jnp.sum(pos_mask.astype(jnp.float32), axis=1, keepdims=True)
    log_frac = jnp.where(pos_mask, jnp.log(pos_term * inv_denom + 1e-5), 0.0)
    sum_logf = jnp.sum(log_frac, axis=1, keepdims=True)                  # (TQ, 1)

    # anchors with no positives are skipped (torch path: 0/0 -> NaN -> continue);
    # detect num_pos == 0 explicitly instead of relying on NaN propagation.
    has_pos = num_pos > 0.0
    loss_i = sum_logf / jnp.maximum(num_pos, 1.0)
    p_loss = -jnp.sum(jnp.where(has_pos, loss_i, 0.0))
    p_nans = jnp.sum(jnp.where(has_pos, 0.0, 1.0))

    loss_ref[...] = jnp.broadcast_to(p_loss, loss_ref.shape)
    nan_ref[...] = jnp.broadcast_to(p_nans, nan_ref.shape)


def _pick_row_tile(batch, cap=128):
    """Largest anchor-row tile that divides B and keeps the block 8-aligned."""
    if batch <= cap:
        return batch                      # block == full dim is always legal
    for t in range(cap, 7, -1):
        if batch % t == 0 and t % 8 == 0:
            return t
    return batch                          # fallback: one monolithic row block


def supcon_loss_lambda(features, labels, domain_labels):
    """features: (B, D); labels, domain_labels: (B,) int. Returns scalar f32."""
    B, D = features.shape
    TQ = _pick_row_tile(B)
    G = B // TQ

    lab_c = labels.astype(jnp.int32).reshape(B, 1)
    lab_r = labels.astype(jnp.int32).reshape(1, B)
    dom_c = domain_labels.astype(jnp.int32).reshape(B, 1)
    dom_r = domain_labels.astype(jnp.int32).reshape(1, B)

    # VMEM budget: resident keys (native dtype, buffered) + f32 copies + slabs.
    f_item = jnp.dtype(features.dtype).itemsize
    est = (2 * B * D * f_item            # buffered resident key block
           + 2 * B * D * 4               # f32 cast + normalized keys
           + 12 * TQ * B * 4             # live (TQ, B) f32 slabs
           + 8 * (TQ + B) * 4
           + (2 << 20))
    vmem_limit = int(min(max(est, 32 * 1024 * 1024), 64 * 1024 * 1024))

    grid_spec = pltpu.PrefetchScalarGridSpec(
        num_scalar_prefetch=0,
        grid=(G,),
        in_specs=[
            pl.BlockSpec((B, D), lambda i: (0, 0)),    # full key set (resident)
            pl.BlockSpec((TQ, 1), lambda i: (i, 0)),   # anchor labels
            pl.BlockSpec((TQ, 1), lambda i: (i, 0)),   # anchor domain labels
            pl.BlockSpec((1, B), lambda i: (0, 0)),    # key labels
            pl.BlockSpec((1, B), lambda i: (0, 0)),    # key domain labels
        ],
        out_specs=[
            pl.BlockSpec((1, 8, 128), lambda i: (i, 0, 0)),  # partial loss per tile
            pl.BlockSpec((1, 8, 128), lambda i: (i, 0, 0)),  # partial nan count
        ],
    )

    loss_parts, nan_parts = pl.pallas_call(
        _supcon_tile_kernel,
        grid_spec=grid_spec,
        out_shape=(jax.ShapeDtypeStruct((G, 8, 128), jnp.float32),
                   jax.ShapeDtypeStruct((G, 8, 128), jnp.float32)),
        compiler_params=pltpu.CompilerParams(
            dimension_semantics=("parallel",),
            vmem_limit_bytes=vmem_limit),
    )(features, lab_c, dom_c, lab_r, dom_r)

    loss = jnp.sum(loss_parts[:, 0, 0])
    nans = jnp.sum(nan_parts[:, 0, 0])
    # matches the reference exactly: loss / (batch_size - nans + 1)
    return loss / (jnp.float32(B) - nans + 1.0)


if __name__ == "__main__":
    key = jax.random.PRNGKey(0)
    k_feat, k_lab, k_dom = jax.random.split(key, 3)

    B, D = 8, 32
    features = jax.random.normal(k_feat, (B, D), dtype=jnp.float32)
    labels = jax.random.randint(k_lab, (B,), 0, 3, dtype=jnp.int32)
    domain_labels = jax.random.randint(k_dom, (B,), 0, 2, dtype=jnp.int32)

    loss = jax.jit(supcon_loss_lambda)(features, labels, domain_labels)
    jax.block_until_ready(loss)
    print("KERNEL_OK")
</pallas_src>

<mosaic_0001>
module attributes {stable_mosaic.version = 11 : i64} {
  func.func @_supcon_tile_kernel(%arg0: i32, %arg1: memref<8x32xf32, #tpu.memory_space<vmem>>, %arg2: memref<8x1xi32, #tpu.memory_space<vmem>>, %arg3: memref<8x1xi32, #tpu.memory_space<vmem>>, %arg4: memref<1x8xi32, #tpu.memory_space<vmem>>, %arg5: memref<1x8xi32, #tpu.memory_space<vmem>>, %arg6: memref<1x8x128xf32, #tpu.memory_space<vmem>>, %arg7: memref<1x8x128xf32, #tpu.memory_space<vmem>>) attributes {dimension_semantics = [#tpu.dimension_semantics<parallel>], iteration_bounds = array<i64: 1>, scalar_prefetch = 0 : i64, scratch_operands = 0 : i64, tpu.core_type = #tpu.core_type<tc>, window_params = [{pipeline_mode = #tpu.pipeline_mode<synchronous>, transform_indices = @transform_0, window_bounds = array<i64: 8, 32>}, {transform_indices = @transform_1, window_bounds = array<i64: 8, 1>}, {transform_indices = @transform_2, window_bounds = array<i64: 8, 1>}, {pipeline_mode = #tpu.pipeline_mode<synchronous>, transform_indices = @transform_3, window_bounds = array<i64: 1, 8>}, {pipeline_mode = #tpu.pipeline_mode<synchronous>, transform_indices = @transform_4, window_bounds = array<i64: 1, 8>}, {transform_indices = @transform_5, window_bounds = array<i64: 1, 8, 128>}, {transform_indices = @transform_6, window_bounds = array<i64: 1, 8, 128>}]} {
    %c0 = arith.constant 0 : index
    %c0_0 = arith.constant 0 : index
    %0 = vector.load %arg1[%c0, %c0_0] : memref<8x32xf32, #tpu.memory_space<vmem>>, vector<8x32xf32>
    %1 = arith.mulf %0, %0 : vector<8x32xf32>
    %cst = arith.constant dense<0.000000e+00> : vector<8xf32>
    %2 = vector.multi_reduction <add>, %1, %cst [1] : vector<8x32xf32> to vector<8xf32>
    %3 = vector.shape_cast %2 : vector<8xf32> to vector<8x1xf32>
    %cst_1 = arith.constant 1.000000e-24 : f32
    %4 = vector.broadcast %cst_1 : f32 to vector<8x1xf32>
    %5 = arith.maximumf %3, %4 : vector<8x1xf32>
    %6 = math.rsqrt %5 : vector<8x1xf32>
    %7 = vector.broadcast %6 : vector<8x1xf32> to vector<8x32xf32>
    %8 = arith.mulf %0, %7 : vector<8x32xf32>
    %c8_i32 = arith.constant 8 : i32
    %9 = arith.muli %arg0, %c8_i32 : i32
    %10 = tpu.assume_multiple %9, 8 : i32
    %11 = arith.index_cast %10 : i32 to index
    %c0_2 = arith.constant 0 : index
    %12 = vector.load %arg1[%11, %c0_2] : memref<8x32xf32, #tpu.memory_space<vmem>>, vector<8x32xf32>
    %13 = arith.mulf %12, %12 : vector<8x32xf32>
    %cst_3 = arith.constant dense<0.000000e+00> : vector<8xf32>
    %14 = vector.multi_reduction <add>, %13, %cst_3 [1] : vector<8x32xf32> to vector<8xf32>
    %15 = vector.shape_cast %14 : vector<8xf32> to vector<8x1xf32>
    %cst_4 = arith.constant 1.000000e-24 : f32
    %16 = vector.broadcast %cst_4 : f32 to vector<8x1xf32>
    %17 = arith.maximumf %15, %16 : vector<8x1xf32>
    %18 = math.rsqrt %17 : vector<8x1xf32>
    %cst_5 = arith.constant 14.2857141 : f32
    %19 = vector.broadcast %cst_5 : f32 to vector<8x1xf32>
    %20 = arith.mulf %18, %19 : vector<8x1xf32>
    %21 = vector.broadcast %20 : vector<8x1xf32> to vector<8x32xf32>
    %22 = arith.mulf %12, %21 : vector<8x32xf32>
    %cst_6 = arith.constant dense<0.000000e+00> : vector<8x8xf32>
    %23 = tpu.matmul %22, %8, %cst_6 {dimension_numbers = #tpu.dot_dimension_numbers<[1], [1], [0], [0], [0, 0, 1, 0], [], []>} : vector<8x32xf32>, vector<8x32xf32>, vector<8x8xf32> -> vector<8x8xf32>
    %c0_7 = arith.constant 0 : index
    %c0_8 = arith.constant 0 : index
    %24 = vector.load %arg2[%c0_7, %c0_8] : memref<8x1xi32, #tpu.memory_space<vmem>>, vector<8x1xi32>
    %c0_9 = arith.constant 0 : index
    %c0_10 = arith.constant 0 : index
    %25 = vector.load %arg4[%c0_9, %c0_10] : memref<1x8xi32, #tpu.memory_space<vmem>>, vector<1x8xi32>
    %26 = vector.broadcast %24 : vector<8x1xi32> to vector<8x8xi32>
    %27 = vector.broadcast %25 : vector<1x8xi32> to vector<8x8xi32>
    %28 = arith.cmpi eq, %26, %27 : vector<8x8xi32>
    %c0_11 = arith.constant 0 : index
    %c0_12 = arith.constant 0 : index
    %29 = vector.load %arg3[%c0_11, %c0_12] : memref<8x1xi32, #tpu.memory_space<vmem>>, vector<8x1xi32>
    %c0_13 = arith.constant 0 : index
    %c0_14 = arith.constant 0 : index
    %30 = vector.load %arg5[%c0_13, %c0_14] : memref<1x8xi32, #tpu.memory_space<vmem>>, vector<1x8xi32>
    %31 = vector.broadcast %29 : vector<8x1xi32> to vector<8x8xi32>
    %32 = vector.broadcast %30 : vector<1x8xi32> to vector<8x8xi32>
    %33 = arith.cmpi eq, %31, %32 : vector<8x8xi32>
    %34 = tpu.iota {dimensions = array<i32: 0>} : vector<8x1xi32>
    %35 = vector.broadcast %10 : i32 to vector<8x1xi32>
    %36 = arith.addi %35, %34 : vector<8x1xi32>
    %37 = tpu.iota {dimensions = array<i32: 1>} : vector<1x8xi32>
    %38 = vector.broadcast %36 : vector<8x1xi32> to vector<8x8xi32>
    %39 = vector.broadcast %37 : vector<1x8xi32> to vector<8x8xi32>
    %40 = arith.cmpi ne, %38, %39 : vector<8x8xi32>
    %cst_15 = arith.constant 5.000000e-01 : f32
    %cst_16 = arith.constant 5.000000e-01 : f32
    %41 = vector.broadcast %cst_15 : f32 to vector<8x8xf32>
    %42 = vector.broadcast %cst_16 : f32 to vector<8x8xf32>
    %43 = arith.select %33, %41, %42 : vector<8x8xi1>, vector<8x8xf32>
    %44 = math.exp %23 : vector<8x8xf32>
    %45 = arith.mulf %43, %44 : vector<8x8xf32>
    %cst_17 = arith.constant 0.000000e+00 : f32
    %46 = vector.broadcast %cst_17 : f32 to vector<8x8xf32>
    %47 = arith.select %40, %45, %46 : vector<8x8xi1>, vector<8x8xf32>
    %48 = arith.andi %28, %40 : vector<8x8xi1>
    %cst_18 = arith.constant 0.000000e+00 : f32
    %49 = vector.broadcast %cst_18 : f32 to vector<8x8xf32>
    %50 = arith.select %28, %47, %49 : vector<8x8xi1>, vector<8x8xf32>
    %cst_19 = arith.constant dense<0.000000e+00> : vector<8xf32>
    %51 = vector.multi_reduction <add>, %47, %cst_19 [1] : vector<8x8xf32> to vector<8xf32>
    %52 = vector.shape_cast %51 : vector<8xf32> to vector<8x1xf32>
    %cst_20 = arith.constant 9.99999974E-6 : f32
    %53 = vector.broadcast %cst_20 : f32 to vector<8x1xf32>
    %54 = arith.addf %52, %53 : vector<8x1xf32>
    %cst_21 = arith.constant 1.000000e+00 : f32
    %55 = vector.broadcast %cst_21 : f32 to vector<8x1xf32>
    %56 = arith.divf %55, %54 : vector<8x1xf32>
    %57 = arith.extui %48 : vector<8x8xi1> to vector<8x8xi32>
    %58 = arith.sitofp %57 : vector<8x8xi32> to vector<8x8xf32>
    %cst_22 = arith.constant dense<0.000000e+00> : vector<8xf32>
    %59 = vector.multi_reduction <add>, %58, %cst_22 [1] : vector<8x8xf32> to vector<8xf32>
    %60 = vector.shape_cast %59 : vector<8xf32> to vector<8x1xf32>
    %61 = vector.broadcast %56 : vector<8x1xf32> to vector<8x8xf32>
    %62 = arith.mulf %50, %61 : vector<8x8xf32>
    %cst_23 = arith.constant 9.99999974E-6 : f32
    %63 = vector.broadcast %cst_23 : f32 to vector<8x8xf32>
    %64 = arith.addf %62, %63 : vector<8x8xf32>
    %65 = math.log %64 : vector<8x8xf32>
    %cst_24 = arith.constant 0.000000e+00 : f32
    %66 = vector.broadcast %cst_24 : f32 to vector<8x8xf32>
    %67 = arith.select %48, %65, %66 : vector<8x8xi1>, vector<8x8xf32>
    %cst_25 = arith.constant dense<0.000000e+00> : vector<8xf32>
    %68 = vector.multi_reduction <add>, %67, %cst_25 [1] : vector<8x8xf32> to vector<8xf32>
    %69 = vector.shape_cast %68 : vector<8xf32> to vector<8x1xf32>
    %cst_26 = arith.constant 0.000000e+00 : f32
    %70 = vector.broadcast %cst_26 : f32 to vector<8x1xf32>
    %71 = arith.cmpf ogt, %60, %70 : vector<8x1xf32>
    %cst_27 = arith.constant 1.000000e+00 : f32
    %72 = vector.broadcast %cst_27 : f32 to vector<8x1xf32>
    %73 = arith.maximumf %60, %72 : vector<8x1xf32>
    %74 = arith.divf %69, %73 : vector<8x1xf32>
    %cst_28 = arith.constant 0.000000e+00 : f32
    %75 = vector.broadcast %cst_28 : f32 to vector<8x1xf32>
    %76 = arith.select %71, %74, %75 : vector<8x1xi1>, vector<8x1xf32>
    %77 = vector.shape_cast %76 : vector<8x1xf32> to vector<1x8x1xf32>
    %cst_29 = arith.constant dense<0.000000e+00> : vector<1xf32>
    %78 = vector.multi_reduction <add>, %77, %cst_29 [1, 2] : vector<1x8x1xf32> to vector<1xf32>
    %79 = vector.shape_cast %78 : vector<1xf32> to vector<1x1x1xf32>
    %80 = vector.extract %79[0, 0, 0] : f32 from vector<1x1x1xf32>
    %cst_30 = arith.constant 0.000000e+00 : f32
    %81 = arith.subf %cst_30, %80 : f32
    %cst_31 = arith.constant 0.000000e+00 : f32
    %cst_32 = arith.constant 1.000000e+00 : f32
    %82 = vector.broadcast %cst_31 : f32 to vector<8x1xf32>
    %83 = vector.broadcast %cst_32 : f32 to vector<8x1xf32>
    %84 = arith.select %71, %82, %83 : vector<8x1xi1>, vector<8x1xf32>
    %85 = vector.shape_cast %84 : vector<8x1xf32> to vector<1x8x1xf32>
    %cst_33 = arith.constant dense<0.000000e+00> : vector<1xf32>
    %86 = vector.multi_reduction <add>, %85, %cst_33 [1, 2] : vector<1x8x1xf32> to vector<1xf32>
    %87 = vector.shape_cast %86 : vector<1xf32> to vector<1x1x1xf32>
    %88 = vector.extract %87[0, 0, 0] : f32 from vector<1x1x1xf32>
    %89 = vector.broadcast %81 : f32 to vector<1x8x128xf32>
    %c0_34 = arith.constant 0 : index
    %c0_35 = arith.constant 0 : index
    %c0_36 = arith.constant 0 : index
    %90 = vector.load %arg6[%c0_34, %c0_35, %c0_36] : memref<1x8x128xf32, #tpu.memory_space<vmem>>, vector<1x8x128xf32>
    tpu.vector_store %arg6[%c0_34, %c0_35, %c0_36], %89 {strides = array<i32>} : memref<1x8x128xf32, #tpu.memory_space<vmem>>, vector<1x8x128xf32>,
    %91 = vector.broadcast %88 : f32 to vector<1x8x128xf32>
    %c0_37 = arith.constant 0 : index
    %c0_38 = arith.constant 0 : index
    %c0_39 = arith.constant 0 : index
    %92 = vector.load %arg7[%c0_37, %c0_38, %c0_39] : memref<1x8x128xf32, #tpu.memory_space<vmem>>, vector<1x8x128xf32>
    tpu.vector_store %arg7[%c0_37, %c0_38, %c0_39], %91 {strides = array<i32>} : memref<1x8x128xf32, #tpu.memory_space<vmem>>, vector<1x8x128xf32>,
    return
  }
  func.func @transform_0(%arg0: i32) -> (i32, i32) {
    %c0_i32 = arith.constant 0 : i32
    %c0_i32_0 = arith.constant 0 : i32
    %c0_i32_1 = arith.constant 0 : i32
    return %c0_i32, %c0_i32_0 : i32, i32
  }
  func.func @transform_1(%arg0: i32) -> (i32, i32) {
    %c0_i32 = arith.constant 0 : i32
    %c0_i32_0 = arith.constant 0 : i32
    return %arg0, %c0_i32 : i32, i32
  }
  func.func @transform_2(%arg0: i32) -> (i32, i32) {
    %c0_i32 = arith.constant 0 : i32
    %c0_i32_0 = arith.constant 0 : i32
    return %arg0, %c0_i32 : i32, i32
  }
  func.func @transform_3(%arg0: i32) -> (i32, i32) {
    %c0_i32 = arith.constant 0 : i32
    %c0_i32_0 = arith.constant 0 : i32
    %c0_i32_1 = arith.constant 0 : i32
    return %c0_i32, %c0_i32_0 : i32, i32
  }
  func.func @transform_4(%arg0: i32) -> (i32, i32) {
    %c0_i32 = arith.constant 0 : i32
    %c0_i32_0 = arith.constant 0 : i32
    %c0_i32_1 = arith.constant 0 : i32
    return %c0_i32, %c0_i32_0 : i32, i32
  }
  func.func @transform_5(%arg0: i32) -> (i32, i32, i32) {
    %c0_i32 = arith.constant 0 : i32
    %c0_i32_0 = arith.constant 0 : i32
    %c0_i32_1 = arith.constant 0 : i32
    return %arg0, %c0_i32, %c0_i32_0 : i32, i32, i32
  }
  func.func @transform_6(%arg0: i32) -> (i32, i32, i32) {
    %c0_i32 = arith.constant 0 : i32
    %c0_i32_0 = arith.constant 0 : i32
    %c0_i32_1 = arith.constant 0 : i32
    return %arg0, %c0_i32, %c0_i32_0 : i32, i32, i32
  }
}

</mosaic_0001>

<llo_original>
// kernel: supcon_loss_lambda.1
$region0: #{supcon_loss_lambda.1}
  #allocation0 [shape = 'u32[]', space=smem, size = 0x4, offset = 0x4, fixed_abs, tag = 'smem constant byte address 0x4 - core index']
  #allocation1 [shape = 'u32[144,128]{1,0:T(1,128)}', space=vmem, size = 0x12000, scoped, tag = 'internal scratch']
  %s0 = inlined_call_operand.vmem [shape: f32[8,32], index: 0, kind: input, shape index: {}]
  %s1 = inlined_call_operand.vmem [shape: s32[8,1], index: 1, kind: input, shape index: {}]
  %s2 = inlined_call_operand.vmem [shape: s32[8,1], index: 2, kind: input, shape index: {}]
  %s3 = inlined_call_operand.vmem [shape: s32[1,8], index: 3, kind: input, shape index: {}]
  %s4 = inlined_call_operand.vmem [shape: s32[1,8], index: 4, kind: input, shape index: {}]
  %s5 = inlined_call_operand.vmem [shape: f32[1,8,128], index: 5, kind: output, shape index: {0}]
  %s6 = inlined_call_operand.vmem [shape: f32[1,8,128], index: 6, kind: output, shape index: {1}]
  %7 = xla_tuple %s5, %s6
  %s8 = sld [smem:[#allocation0]]
  $region38: #{supcon_loss_lambda.1} parent=0
    _
  %s10 = ssub.s32 1, %s8
  %s11 = scalar_select 0, %s10, %s8
  // Predicated region
  $region2: #{supcon_loss_lambda.1} parent=0 // pred_check
    _
  $region3: #{supcon_loss_lambda.1} parent=0 // pred_check_branch
    %13 = sbr.rel (0) target = $region5
  $region4: #{supcon_loss_lambda.1} parent=0 // pred_region
    _
  $region5: #{supcon_loss_lambda.1} parent=0 // pred_fallthru
    _
  // Predicated region
  $region6: #{supcon_loss_lambda.1} parent=0 // pred_check
    _
  $region7: #{supcon_loss_lambda.1} parent=0 // pred_check_branch
    %15 = sbr.rel (0) target = $region9
  $region8: #{supcon_loss_lambda.1} parent=0 // pred_region
    _
  $region9: #{supcon_loss_lambda.1} parent=0 // pred_fallthru
    _
  // Predicated region
  $region10: #{supcon_loss_lambda.1} parent=0 // pred_check
    _
  $region11: #{supcon_loss_lambda.1} parent=0 // pred_check_branch
    %17 = sbr.rel (0) target = $region13
  $region12: #{supcon_loss_lambda.1} parent=0 // pred_region
    _
  $region13: #{supcon_loss_lambda.1} parent=0 // pred_fallthru
    _
  // Predicated region
  $region14: #{supcon_loss_lambda.1} parent=0 // pred_check
    _
  $region15: #{supcon_loss_lambda.1} parent=0 // pred_check_branch
    %19 = sbr.rel (0) target = $region17
  $region16: #{supcon_loss_lambda.1} parent=0 // pred_region
    _
  $region17: #{supcon_loss_lambda.1} parent=0 // pred_fallthru
    _
  // Predicated region
  $region18: #{supcon_loss_lambda.1} parent=0 // pred_check
    _
  $region19: #{supcon_loss_lambda.1} parent=0 // pred_check_branch
    %21 = sbr.rel (0) target = $region21
  $region20: #{supcon_loss_lambda.1} parent=0 // pred_region
    _
  $region21: #{supcon_loss_lambda.1} parent=0 // pred_fallthru
    _
  %v22 = vld [vmem:[%s0] sm:$0xff]
  %v23 = vmul.f32 %v22, %v22
  %vm24 = vcmask 261120
  %v25 = vsel %vm24, %v23, 0.0
  %26 = vadd.xlane.f32.xlu0 %v25
  %v27 = vpop.xlane.xlu0 %26
  %v28 = vmax.f32 %v27, 1e-24
  %v29 = vrsqrt.pop %v28
  %v30 = vmul.f32 %v22, %v29
  %s31 = smul.u32 0, 8
  %s32 = scalar_lea.vmem %s0, %s31
  %v33 = vld [vmem:[%s32] sm:$0xff]
  %v34 = vmul.f32 %v33, %v33
  %v35 = vsel %vm24, %v34, 0.0
  %36 = vadd.xlane.f32.xlu0 %v35
  %v37 = vpop.xlane.xlu0 %36
  %v38 = vmax.f32 %v37, 1e-24
  %v39 = vrsqrt.pop %v38
  %v40 = vmul.f32 %v39, 14.285714
  %v41 = vmul.f32 %v33, %v40
  %v43 = vsel %vm24, %v41, 0
  %v46 = vsel %vm24, %v30, 0
  %48 = vmatprep.subr.mxu0 0.0
  %49 = vmatpush1.xpose.msra.mxu0 %v46
  %50 = vmatprep.subr.mxu0 0.0
  %51 = vmatpush1.xpose.msra.mxu0 0.0
  %52 = vmatprep.subr.mxu0 0.0
  %53 = vmatpush1.xpose.msra.mxu0 0.0
  %54 = vmatprep.subr.mxu0 0.0
  %55 = vmatpush1.xpose.msra.mxu0 0.0
  %56 = vmatprep.subr.mxu0 0.0
  %57 = vmatpush1.xpose.msra.mxu0 0.0
  %58 = vmatprep.subr.mxu0 0.0
  %59 = vmatpush1.xpose.msra.mxu0 0.0
  %60 = vmatprep.subr.mxu0 0.0
  %61 = vmatpush1.xpose.msra.mxu0 0.0
  %62 = vmatprep.subr.mxu0 0.0
  %63 = vmatpush1.xpose.msra.mxu0 0.0
  %64 = vmatprep.subr.mxu0 0.0
  %65 = vmatpush1.xpose.msra.mxu0 0.0
  %66 = vmatprep.subr.mxu0 0.0
  %67 = vmatpush1.xpose.msra.mxu0 0.0
  %68 = vmatprep.subr.mxu0 0.0
  %69 = vmatpush1.xpose.msra.mxu0 0.0
  %70 = vmatprep.subr.mxu0 0.0
  %71 = vmatpush1.xpose.msra.mxu0 0.0
  %72 = vmatprep.subr.mxu0 0.0
  %73 = vmatpush1.xpose.msra.mxu0 0.0
  %74 = vmatprep.subr.mxu0 0.0
  %75 = vmatpush1.xpose.msra.mxu0 0.0
  %76 = vmatprep.subr.mxu0 0.0
  %77 = vmatpush1.xpose.msra.mxu0 0.0
  %78 = vmatprep.subr.mxu0 0.0
  %79 = vmatpush1.xpose.msra.mxu0 0.0
  %80 = vmatprep.subr.mxu0 0.0
  %81 = vmatpush1.xpose.msra.mxu0 0.0
  %82 = vmatprep.subr.mxu0 0.0
  %83 = vmatpush1.xpose.msra.mxu0 0.0
  %84 = vmatprep.subr.mxu0 0.0
  %85 = vmatpush1.xpose.msra.mxu0 0.0
  %86 = vmatprep.subr.mxu0 0.0
  %87 = vmatpush1.xpose.msra.mxu0 0.0
  %88 = vmatprep.subr.mxu0 0.0
  %89 = vmatpush1.xpose.msra.mxu0 0.0
  %90 = vmatprep.subr.mxu0 0.0
  %91 = vmatpush1.xpose.msra.mxu0 0.0
  %92 = vmatprep.subr.mxu0 0.0
  %93 = vmatpush1.xpose.msra.mxu0 0.0
  %94 = vmatprep.subr.mxu0 0.0
  %95 = vmatpush1.xpose.msra.mxu0 0.0
  %96 = vmatprep.subr.mxu0 0.0
  %97 = vmatpush1.xpose.msra.mxu0 0.0
  %98 = vmatprep.subr.mxu0 0.0
  %99 = vmatpush1.xpose.msra.mxu0 0.0
  %100 = vmatprep.subr.mxu0 0.0
  %101 = vmatpush1.xpose.msra.mxu0 0.0
  %102 = vmatprep.subr.mxu0 0.0
  %103 = vmatpush1.xpose.msra.mxu0 0.0
  %104 = vmatprep.subr.mxu0 0.0
  %105 = vmatpush1.xpose.msra.mxu0 0.0
  %106 = vmatprep.subr.mxu0 0.0
  %107 = vmatpush1.xpose.msra.mxu0 0.0
  %108 = vmatprep.subr.mxu0 0.0
  %109 = vmatpush1.xpose.msra.mxu0 0.0
  %110 = vmatprep.subr.mxu0 0.0
  %111 = vmatpush1.xpose.msra.mxu0 0.0
  %112 = vmatprep.mubr.f32.mxu0 0.0
  %113 = vmatmul.mubr.f32.gmra.mrb[0].mxu0 %v43
  %v114 = vpop.f32.mrb[0].mxu0
  %v115 = vadd.f32 0.0, %v114
  %v116 = vpop.f32.mrb[0].mxu0
  %117 = vdwg.mxu0
  %v118 = vld [vmem:[%s1] sm:$0xff]
  %v119 = vld [vmem:[%s3] sm:$0x1]
  %120 = vset.pattern.permute.xlu0 0
  %121 = vperm.xlu0 %120, %v118
  %v122 = vpop.permute.xlu0 %121
  %v123 = vlaneseq
  %v124 = vshrl.u32 %v123, 7
  %v125 = vsub.s32 0, %v124
  %v126 = vrot.slane %v119, %v125
  %vm127 = vcmp.eq.s32.totalorder %v122, %v126
  %v128 = vlaneseq
  %v129 = vshrl.u32 %v128, 7
  %v130 = vstv %s31
  %v131 = vadd.s32 %v130, %v129
  %v132 = vlaneseq
  %v133 = vand.u32 %v132, 127
  %vm134 = vcmp.ne.s32.totalorder %v131, %v133
  %v135 = vmul.f32 %v115, 1.442695
  %v136 = vpow.pop %v135
  %v137 = vmul.f32 %v136, 0.5
  %v138 = vsel %vm134, %v137, 0.0
  %vm139 = vmand %vm127, %vm134
  %v140 = vsel %vm127, %v138, 0.0
  %vm141 = vcmask 64512
  %v142 = vsel %vm141, %v138, 0.0
  %143 = vadd.xlane.f32.xlu0 %v142
  %v144 = vpop.xlane.xlu0 %143
  %v145 = vadd.f32 %v144, 1e-05
  %v146 = vrcp.pop %v145
  %v147 = vmul.f32 1.0, %v146
  %v148 = vsel %vm139, 1, 0
  %v149 = vcvt.s32.f32 %v148
  %v150 = vsel %vm141, %v149, 0.0
  %151 = vadd.xlane.f32.xlu0 %v150
  %v152 = vpop.xlane.xlu0 %151
  %v153 = vmul.f32 %v140, %v147
  %v154 = vadd.f32 %v153, 1e-05
  %v155 = vlog2.pop %v154
  %v156 = vmul.f32 %v155, 0.6931472
  %v157 = vsel %vm139, %v156, 0.0
  %v158 = vsel %vm141, %v157, 0.0
  %159 = vadd.xlane.f32.xlu0 %v158
  %v160 = vpop.xlane.xlu0 %159
  %vm161 = vcmp.gt.f32.partialorder %v152, 0.0
  %v162 = vmax.f32 %v152, 1.0
  %v163 = vrcp.pop %v162
  %v164 = vmul.f32 %v160, %v163
  %v165 = vsel %vm161, %v164, 0.0
  %vm166 = vcmask 7168
  %v167 = vsel %vm166, %v165, 0.0
  %168 = vadd.xlane.f32.xlu0 %v167
  %v169 = vpop.xlane.xlu0 %168
  %v170 = vrot.slane %v169, 4
  %v171 = vadd.f32 %v169, %v170
  %v172 = vrot.slane %v171, 2
  %v173 = vadd.f32 %v171, %v172
  %v174 = vrot.slane %v173, 1
  %v175 = vadd.f32 %v173, %v174
  %s176 = vtos %v175
  %s177 = ssub.f32 0.0, %s176
  %v178 = vsel %vm161, 0.0, 1.0
  %v179 = vsel %vm166, %v178, 0.0
  %180 = vadd.xlane.f32.xlu0 %v179
  %v181 = vpop.xlane.xlu0 %180
  %v182 = vrot.slane %v181, 4
  %v183 = vadd.f32 %v181, %v182
  %v184 = vrot.slane %v183, 2
  %v185 = vadd.f32 %v183, %v184
  %v186 = vrot.slane %v185, 1
  %v187 = vadd.f32 %v185, %v186
  %s188 = vtos %v187
  %v189 = vstv %s177
  %190 = vst [vmem:[%s5] sm:$0xff] %v189
  %v191 = vstv %s188
  %192 = vst [vmem:[%s6] sm:$0xff] %v191
  // Predicated region
  $region22: #{supcon_loss_lambda.1} parent=0 // pred_check
    _
  $region23: #{supcon_loss_lambda.1} parent=0 // pred_check_branch
    %194 = sbr.rel (0) target = $region25
  $region24: #{supcon_loss_lambda.1} parent=0 // pred_region
    _
  $region25: #{supcon_loss_lambda.1} parent=0 // pred_fallthru
    _
  // Predicated region
  $region26: #{supcon_loss_lambda.1} parent=0 // pred_check
    _
  $region27: #{supcon_loss_lambda.1} parent=0 // pred_check_branch
    %196 = sbr.rel (0) target = $region29
  $region28: #{supcon_loss_lambda.1} parent=0 // pred_region
    _
  $region29: #{supcon_loss_lambda.1} parent=0 // pred_fallthru
    _
  // Predicated region
  $region30: #{supcon_loss_lambda.1} parent=0 // pred_check
    _
  $region31: #{supcon_loss_lambda.1} parent=0 // pred_check_branch
    %198 = sbr.rel (0) target = $region33
  $region32: #{supcon_loss_lambda.1} parent=0 // pred_region
    _
  $region33: #{supcon_loss_lambda.1} parent=0 // pred_fallthru
    _
  // Predicated region
  $region34: #{supcon_loss_lambda.1} parent=0 // pred_check
    _
  $region35: #{supcon_loss_lambda.1} parent=0 // pred_check_branch
    %200 = sbr.rel (0) target = $region37
  $region36: #{supcon_loss_lambda.1} parent=0 // pred_region
    _
  $region37: #{supcon_loss_lambda.1} parent=0 // pred_fallthru
    _

</llo_original>
